<compile_context>
chip_gen: v5e
topology: v5e:2x2
jax: 0.10.0
libtpu: 0.0.40
codegen_flags: <defaults>
</compile_context>

<pallas_src>
import functools
import math

import jax
import jax.numpy as jnp
from jax.experimental import pallas as pl
from jax.experimental.pallas import tpu as pltpu

LANES = 128          # lane width / padded feature dim
N_W_BLOCKS = 5       # fc1, fc2, fc3, fused head stage 1, fused head stage 2


# ----------------------------------------------------------------------------
# Pallas kernel: fused MLP + dueling head (single invocation, all in VMEM)
# ----------------------------------------------------------------------------
def dueling_q_kernel(x_ref, w_ref, b_ref, q_ref, *, action_size):
    x = x_ref[...]                       # (BP, 128), zero-padded lanes/rows
    b = b_ref[...]                       # (8, 128)

    def layer(h, w_block, b_row, relu=True):
        y = jnp.dot(h, w_block, preferred_element_type=jnp.float32) + b_row
        return jnp.maximum(y, 0.0) if relu else y

    # Static, 128-row-aligned slices of the packed weight slab.
    h1 = layer(x,  w_ref[0 * LANES:1 * LANES, :], b[0:1, :])          # fc1
    h2 = layer(h1, w_ref[1 * LANES:2 * LANES, :], b[1:2, :])          # fc2
    h3 = layer(h2, w_ref[2 * LANES:3 * LANES, :], b[2:3, :])          # fc3
    # Fused head stage 1: cols 0:32 = adv hidden, cols 32:64 = val hidden.
    hh = layer(h3, w_ref[3 * LANES:4 * LANES, :], b[3:4, :])
    # Fused head stage 2 (block-diagonal): cols 0:A = adv, col A = val.
    head = layer(hh, w_ref[4 * LANES:5 * LANES, :], b[4:5, :], relu=False)

    # Dueling combine on the full 128-lane tile using lane masks (no partial
    # loads/stores; padded lanes of `head` are exact zeros by construction).
    lane = jax.lax.broadcasted_iota(jnp.int32, head.shape, dimension=1)
    adv_mask = (lane < action_size).astype(jnp.float32)
    val_mask = (lane == action_size).astype(jnp.float32)

    adv_mean = jnp.sum(head * adv_mask, axis=1, keepdims=True) * (1.0 / action_size)
    val = jnp.sum(head * val_mask, axis=1, keepdims=True)      # (BP, 1)

    # Lanes 0:A hold Q = val + adv - mean(adv); all other lanes forced to 0.
    q_ref[...] = (head + val - adv_mean) * adv_mask


# ----------------------------------------------------------------------------
# Wrapper: pad inputs, launch single-shot kernel, slice lane-dense result
# ----------------------------------------------------------------------------
def dueling_q_forward(x, packed, action_size):
    """x: (B, state_size) f32. packed: (w_slab, b_slab). Returns (B, action_size)."""
    w_slab, b_slab = packed
    B, state_size = x.shape
    BP = max(8, ((B + 7) // 8) * 8)      # pad batch to f32 sublane multiple

    x_pad = jnp.zeros((BP, LANES), jnp.float32).at[:B, :state_size].set(x)

    # Advisory cost hint for XLA scheduling around this tiny custom call.
    flops = 2 * BP * LANES * LANES * N_W_BLOCKS
    bytes_accessed = 4 * (x_pad.size + w_slab.size + b_slab.size + BP * LANES)

    q_pad = pl.pallas_call(
        functools.partial(dueling_q_kernel, action_size=action_size),
        out_shape=jax.ShapeDtypeStruct((BP, LANES), jnp.float32),
        in_specs=[pl.BlockSpec(memory_space=pltpu.MemorySpace.VMEM)] * 3,
        out_specs=pl.BlockSpec(memory_space=pltpu.MemorySpace.VMEM),
        cost_estimate=pl.CostEstimate(
            flops=flops, transcendentals=0, bytes_accessed=bytes_accessed
        ),
    )(x_pad, w_slab, b_slab)

    return q_pad[:B, :action_size]


# ----------------------------------------------------------------------------
# Parameter packing: 14 tensors -> one weight slab + one bias slab (pre-padded)
# ----------------------------------------------------------------------------
def pack_params(p, state_size, action_size):
    A = action_size
    w = jnp.zeros((N_W_BLOCKS * LANES, LANES), jnp.float32)
    # block 0: fc1  (state_size -> 64)
    w = w.at[0 * LANES:0 * LANES + state_size, 0:64].set(p["w1"])
    # block 1: fc2  (64 -> 64)
    w = w.at[1 * LANES:1 * LANES + 64, 0:64].set(p["w2"])
    # block 2: fc3  (64 -> 32)
    w = w.at[2 * LANES:2 * LANES + 64, 0:32].set(p["w3"])
    # block 3: fused head stage 1  (32 -> [adv 32 | val 32])
    w = w.at[3 * LANES:3 * LANES + 32, 0:32].set(p["wa1"])
    w = w.at[3 * LANES:3 * LANES + 32, 32:64].set(p["wv1"])
    # block 4: fused head stage 2, block-diagonal (64 -> [adv A | val 1])
    w = w.at[4 * LANES:4 * LANES + 32, 0:A].set(p["wa2"])
    w = w.at[4 * LANES + 32:4 * LANES + 64, A:A + 1].set(p["wv2"])

    b = jnp.zeros((8, LANES), jnp.float32)
    b = b.at[0, 0:64].set(p["b1"][0])
    b = b.at[1, 0:64].set(p["b2"][0])
    b = b.at[2, 0:32].set(p["b3"][0])
    b = b.at[3, 0:32].set(p["ba1"][0])
    b = b.at[3, 32:64].set(p["bv1"][0])
    b = b.at[4, 0:A].set(p["ba2"][0])
    b = b.at[4, A].set(p["bv2"][0, 0])
    return w, b


# ----------------------------------------------------------------------------
# Deterministic synthetic parameter construction (mirrors torch __init__)
# ----------------------------------------------------------------------------
def _linear_params(key, in_f, out_f):
    kw, kb = jax.random.split(key)
    bound = 1.0 / math.sqrt(in_f)
    w = jax.random.uniform(kw, (in_f, out_f), jnp.float32, -bound, bound)
    b = jax.random.uniform(kb, (1, out_f), jnp.float32, -bound, bound)
    return w, b


def _scale_noise(key, size):
    x = jax.random.normal(key, (size,), jnp.float32)
    return jnp.sign(x) * jnp.sqrt(jnp.abs(x))


def _noisy_linear_params(key, in_f, out_f, std_init=0.5):
    """NoisyLinear effective (training-mode) weight/bias: mu + sigma * eps."""
    # TODO(synk): noise sampling (sample_noise) stays in host-side JAX; only the
    # effective weights enter the kernel.
    kmu_w, kmu_b, kin, kout = jax.random.split(key, 4)
    mu_range = 1.0 / math.sqrt(in_f)
    weight_mu = jax.random.uniform(kmu_w, (in_f, out_f), jnp.float32, -mu_range, mu_range)
    bias_mu = jax.random.uniform(kmu_b, (1, out_f), jnp.float32, -mu_range, mu_range)
    weight_sigma = jnp.full((in_f, out_f), std_init / math.sqrt(in_f), jnp.float32)
    bias_sigma = jnp.full((1, out_f), std_init / math.sqrt(out_f), jnp.float32)

    eps_in = _scale_noise(kin, in_f)
    eps_out = _scale_noise(kout, out_f)
    weight_eps = eps_in[:, None] * eps_out[None, :]   # (in, out) == torch ger().T
    bias_eps = eps_out[None, :]

    return weight_mu + weight_sigma * weight_eps, bias_mu + bias_sigma * bias_eps


def make_params(key, state_size, action_size):
    fc1_units, fc2_units, fc3_units, fc4_units = 64, 64, 32, 32
    keys = jax.random.split(key, 7)
    w1, b1 = _linear_params(keys[0], state_size, fc1_units)
    w2, b2 = _linear_params(keys[1], fc1_units, fc2_units)
    w3, b3 = _linear_params(keys[2], fc2_units, fc3_units)
    wa1, ba1 = _noisy_linear_params(keys[3], fc3_units, fc4_units)
    wa2, ba2 = _noisy_linear_params(keys[4], fc4_units, action_size)
    wv1, bv1 = _noisy_linear_params(keys[5], fc3_units, fc4_units)
    wv2, bv2 = _noisy_linear_params(keys[6], fc4_units, 1)
    return dict(
        w1=w1, b1=b1, w2=w2, b2=b2, w3=w3, b3=b3,
        wa1=wa1, ba1=ba1, wa2=wa2, ba2=ba2,
        wv1=wv1, bv1=bv1, wv2=wv2, bv2=bv2,
    )


# Pure-JAX reference for correctness check (unpacked params, torch semantics).
def reference_forward(x, p):
    h1 = jax.nn.relu(x @ p["w1"] + p["b1"])
    h2 = jax.nn.relu(h1 @ p["w2"] + p["b2"])
    h3 = jax.nn.relu(h2 @ p["w3"] + p["b3"])
    adv = jax.nn.relu(h3 @ p["wa1"] + p["ba1"])
    val = jax.nn.relu(h3 @ p["wv1"] + p["bv1"])
    adv = adv @ p["wa2"] + p["ba2"]
    val = val @ p["wv2"] + p["bv2"]
    return val + adv - jnp.mean(adv, axis=1, keepdims=True)


if __name__ == "__main__":
    state_size = 8
    action_size = 4
    batch = 2

    key = jax.random.PRNGKey(0)
    k_param, k_x = jax.random.split(key)
    params = make_params(k_param, state_size, action_size)
    packed = pack_params(params, state_size, action_size)
    x = jax.random.normal(k_x, (batch, state_size), jnp.float32)

    q = dueling_q_forward(x, packed, action_size)
    q = jax.block_until_ready(q)

    q_ref = reference_forward(x, params)
    assert q.shape == (batch, action_size)
    assert jnp.allclose(q, q_ref, atol=1e-4, rtol=1e-4), (q, q_ref)

    print("KERNEL_OK")
</pallas_src>

<mosaic_0001>
module attributes {stable_mosaic.version = 11 : i64} {
  func.func @dueling_q_kernel(%arg0: memref<8x128xf32, #tpu.memory_space<vmem>>, %arg1: memref<640x128xf32, #tpu.memory_space<vmem>>, %arg2: memref<8x128xf32, #tpu.memory_space<vmem>>, %arg3: memref<8x128xf32, #tpu.memory_space<vmem>>) attributes {dimension_semantics = [], scalar_prefetch = 0 : i64, scratch_operands = 0 : i64, tpu.core_type = #tpu.core_type<tc>} {
    %c0 = arith.constant 0 : index
    %c0_0 = arith.constant 0 : index
    %0 = vector.load %arg0[%c0, %c0_0] : memref<8x128xf32, #tpu.memory_space<vmem>>, vector<8x128xf32>
    %c0_1 = arith.constant 0 : index
    %c0_2 = arith.constant 0 : index
    %1 = vector.load %arg2[%c0_1, %c0_2] : memref<8x128xf32, #tpu.memory_space<vmem>>, vector<8x128xf32>
    %c0_3 = arith.constant 0 : index
    %c0_4 = arith.constant 0 : index
    %2 = vector.load %arg1[%c0_3, %c0_4] : memref<640x128xf32, #tpu.memory_space<vmem>>, vector<128x128xf32>
    %3 = vector.extract_strided_slice %1 {offsets = [0, 0], sizes = [1, 128], strides = [1, 1]} : vector<8x128xf32> to vector<1x128xf32>
    %cst = arith.constant dense<0.000000e+00> : vector<8x128xf32>
    %4 = tpu.matmul %0, %2, %cst {dimension_numbers = #tpu.dot_dimension_numbers<[1], [0], [0], [1], [0, 0, 1, 1], [], []>} : vector<8x128xf32>, vector<128x128xf32>, vector<8x128xf32> -> vector<8x128xf32>
    %5 = vector.broadcast %3 : vector<1x128xf32> to vector<8x128xf32>
    %6 = arith.addf %4, %5 : vector<8x128xf32>
    %cst_5 = arith.constant 0.000000e+00 : f32
    %7 = vector.broadcast %cst_5 : f32 to vector<8x128xf32>
    %8 = arith.maximumf %6, %7 : vector<8x128xf32>
    %c128 = arith.constant 128 : index
    %c0_6 = arith.constant 0 : index
    %9 = vector.load %arg1[%c128, %c0_6] : memref<640x128xf32, #tpu.memory_space<vmem>>, vector<128x128xf32>
    %10 = vector.extract_strided_slice %1 {offsets = [1, 0], sizes = [1, 128], strides = [1, 1]} : vector<8x128xf32> to vector<1x128xf32>
    %cst_7 = arith.constant dense<0.000000e+00> : vector<8x128xf32>
    %11 = tpu.matmul %8, %9, %cst_7 {dimension_numbers = #tpu.dot_dimension_numbers<[1], [0], [0], [1], [0, 0, 1, 1], [], []>} : vector<8x128xf32>, vector<128x128xf32>, vector<8x128xf32> -> vector<8x128xf32>
    %12 = vector.broadcast %10 : vector<1x128xf32> to vector<8x128xf32>
    %13 = arith.addf %11, %12 : vector<8x128xf32>
    %cst_8 = arith.constant 0.000000e+00 : f32
    %14 = vector.broadcast %cst_8 : f32 to vector<8x128xf32>
    %15 = arith.maximumf %13, %14 : vector<8x128xf32>
    %c256 = arith.constant 256 : index
    %c0_9 = arith.constant 0 : index
    %16 = vector.load %arg1[%c256, %c0_9] : memref<640x128xf32, #tpu.memory_space<vmem>>, vector<128x128xf32>
    %17 = vector.extract_strided_slice %1 {offsets = [2, 0], sizes = [1, 128], strides = [1, 1]} : vector<8x128xf32> to vector<1x128xf32>
    %cst_10 = arith.constant dense<0.000000e+00> : vector<8x128xf32>
    %18 = tpu.matmul %15, %16, %cst_10 {dimension_numbers = #tpu.dot_dimension_numbers<[1], [0], [0], [1], [0, 0, 1, 1], [], []>} : vector<8x128xf32>, vector<128x128xf32>, vector<8x128xf32> -> vector<8x128xf32>
    %19 = vector.broadcast %17 : vector<1x128xf32> to vector<8x128xf32>
    %20 = arith.addf %18, %19 : vector<8x128xf32>
    %cst_11 = arith.constant 0.000000e+00 : f32
    %21 = vector.broadcast %cst_11 : f32 to vector<8x128xf32>
    %22 = arith.maximumf %20, %21 : vector<8x128xf32>
    %c384 = arith.constant 384 : index
    %c0_12 = arith.constant 0 : index
    %23 = vector.load %arg1[%c384, %c0_12] : memref<640x128xf32, #tpu.memory_space<vmem>>, vector<128x128xf32>
    %24 = vector.extract_strided_slice %1 {offsets = [3, 0], sizes = [1, 128], strides = [1, 1]} : vector<8x128xf32> to vector<1x128xf32>
    %cst_13 = arith.constant dense<0.000000e+00> : vector<8x128xf32>
    %25 = tpu.matmul %22, %23, %cst_13 {dimension_numbers = #tpu.dot_dimension_numbers<[1], [0], [0], [1], [0, 0, 1, 1], [], []>} : vector<8x128xf32>, vector<128x128xf32>, vector<8x128xf32> -> vector<8x128xf32>
    %26 = vector.broadcast %24 : vector<1x128xf32> to vector<8x128xf32>
    %27 = arith.addf %25, %26 : vector<8x128xf32>
    %cst_14 = arith.constant 0.000000e+00 : f32
    %28 = vector.broadcast %cst_14 : f32 to vector<8x128xf32>
    %29 = arith.maximumf %27, %28 : vector<8x128xf32>
    %c512 = arith.constant 512 : index
    %c0_15 = arith.constant 0 : index
    %30 = vector.load %arg1[%c512, %c0_15] : memref<640x128xf32, #tpu.memory_space<vmem>>, vector<128x128xf32>
    %31 = vector.extract_strided_slice %1 {offsets = [4, 0], sizes = [1, 128], strides = [1, 1]} : vector<8x128xf32> to vector<1x128xf32>
    %cst_16 = arith.constant dense<0.000000e+00> : vector<8x128xf32>
    %32 = tpu.matmul %29, %30, %cst_16 {dimension_numbers = #tpu.dot_dimension_numbers<[1], [0], [0], [1], [0, 0, 1, 1], [], []>} : vector<8x128xf32>, vector<128x128xf32>, vector<8x128xf32> -> vector<8x128xf32>
    %33 = vector.broadcast %31 : vector<1x128xf32> to vector<8x128xf32>
    %34 = arith.addf %32, %33 : vector<8x128xf32>
    %35 = tpu.iota {dimensions = array<i32: 1>} : vector<8x128xi32>
    %c4_i32 = arith.constant 4 : i32
    %36 = vector.broadcast %c4_i32 : i32 to vector<8x128xi32>
    %37 = arith.cmpi slt, %35, %36 : vector<8x128xi32>
    %38 = arith.extui %37 : vector<8x128xi1> to vector<8x128xi32>
    %39 = arith.sitofp %38 : vector<8x128xi32> to vector<8x128xf32>
    %c4_i32_17 = arith.constant 4 : i32
    %40 = vector.broadcast %c4_i32_17 : i32 to vector<8x128xi32>
    %41 = arith.cmpi eq, %35, %40 : vector<8x128xi32>
    %42 = arith.extui %41 : vector<8x128xi1> to vector<8x128xi32>
    %43 = arith.sitofp %42 : vector<8x128xi32> to vector<8x128xf32>
    %44 = arith.mulf %34, %39 : vector<8x128xf32>
    %cst_18 = arith.constant dense<0.000000e+00> : vector<8xf32>
    %45 = vector.multi_reduction <add>, %44, %cst_18 [1] : vector<8x128xf32> to vector<8xf32>
    %46 = vector.shape_cast %45 : vector<8xf32> to vector<8x1xf32>
    %cst_19 = arith.constant 2.500000e-01 : f32
    %47 = vector.broadcast %cst_19 : f32 to vector<8x1xf32>
    %48 = arith.mulf %46, %47 : vector<8x1xf32>
    %49 = arith.mulf %34, %43 : vector<8x128xf32>
    %cst_20 = arith.constant dense<0.000000e+00> : vector<8xf32>
    %50 = vector.multi_reduction <add>, %49, %cst_20 [1] : vector<8x128xf32> to vector<8xf32>
    %51 = vector.shape_cast %50 : vector<8xf32> to vector<8x1xf32>
    %52 = vector.broadcast %51 : vector<8x1xf32> to vector<8x128xf32>
    %53 = arith.addf %34, %52 : vector<8x128xf32>
    %54 = vector.broadcast %48 : vector<8x1xf32> to vector<8x128xf32>
    %55 = arith.subf %53, %54 : vector<8x128xf32>
    %56 = arith.mulf %55, %39 : vector<8x128xf32>
    %c0_21 = arith.constant 0 : index
    %c0_22 = arith.constant 0 : index
    %57 = vector.load %arg3[%c0_21, %c0_22] : memref<8x128xf32, #tpu.memory_space<vmem>>, vector<8x128xf32>
    tpu.vector_store %arg3[%c0_21, %c0_22], %56 {strides = array<i32>} : memref<8x128xf32, #tpu.memory_space<vmem>>, vector<8x128xf32>,
    return
  }
}

</mosaic_0001>

<llo_original>
// kernel: tpu_custom_call.1
$region0: #{tpu_custom_call.1}
  #allocation0 [shape = 'u32[]', space=smem, size = 0x4, offset = 0x4, fixed_abs, tag = 'smem constant byte address 0x4 - core index']
  #allocation1 [shape = 'u32[72,128]{1,0:T(1,128)}', space=vmem, size = 0x9000, scoped, tag = 'internal scratch']
  %s0 = inlined_call_operand.hbm [shape: f32[8,128], index: 0, kind: input, shape index: {}]
  %s1 = inlined_call_operand.hbm [shape: f32[640,128], index: 1, kind: input, shape index: {}]
  %s2 = inlined_call_operand.hbm [shape: f32[8,128], index: 2, kind: input, shape index: {}]
  %s3 = inlined_call_operand.hbm [shape: f32[8,128], index: 3, kind: output, shape index: {}]
  %s4 = sld [smem:[#allocation0]]
  $region34: #{tpu_custom_call.1} parent=0
    _
  %s6 = ssub.s32 1, %s4
  %s7 = scalar_select 0, %s6, %s4
  $region1: #{tpu_custom_call.1} parent=0
    #allocation2 [shape = 'u8[4096]{0}', space=vmem, size = 0x1000, scoped, tag = 'input window, operand 0, single buffered']
    #allocation3 [shape = 's32[1]{0}', space=sflag, size = 0x4, scoped, tag = 'scoped memory for tpu_custom_call.1']
    #allocation4 [shape = 's32[1]{0}', space=sflag, size = 0x4, scoped, tag = 'scoped memory for tpu_custom_call.1']
    #allocation5 [shape = 'u8[327680]{0}', space=vmem, size = 0x50000, scoped, tag = 'input window, operand 1, single buffered']
    #allocation6 [shape = 's32[1]{0}', space=sflag, size = 0x4, scoped, tag = 'scoped memory for tpu_custom_call.1']
    #allocation7 [shape = 'u8[4096]{0}', space=vmem, size = 0x1000, scoped, tag = 'input window, operand 2, single buffered']
    #allocation8 [shape = 'u8[4096]{0}', space=vmem, size = 0x1000, scoped, tag = 'output window, operand 0, single buffered']
    %8 = vsyncpa [#allocation3], 0
    %9 = vsyncpa [#allocation6], 0
    %10 = vsyncpa [#allocation4], 0
    // Predicated region
    $region2: #{tpu_custom_call.1} parent=1 // pred_check
      _
    $region3: #{tpu_custom_call.1} parent=1 // pred_check_branch
      %12 = sbr.rel (0) target = $region5
    $region4: #{tpu_custom_call.1} parent=1 // pred_region
      %14 = vsyncadd [#allocation3], 0
      %s16 = sshll.u32 %s0, 4
      %s17 = int_to_ptr.hbm [resolvable:$true] %s16
      %s18 = sshll.u32 [#allocation2], 4
      %s19 = int_to_ptr.vmem [resolvable:$true] %s18
      %21 = dma.hbm_to_vmem [thread:$0]  %s17, 128, %s19, [#allocation3]
    $region5: #{tpu_custom_call.1} parent=1 // pred_fallthru
      _
    // Predicated region
    $region6: #{tpu_custom_call.1} parent=1 // pred_check
      _
    $region7: #{tpu_custom_call.1} parent=1 // pred_check_branch
      %23 = sbr.rel (0) target = $region9
    $region8: #{tpu_custom_call.1} parent=1 // pred_region
      %25 = vsyncadd [#allocation6], 0
      %s26 = sshll.u32 %s1, 4
      %s27 = int_to_ptr.hbm [resolvable:$true] %s26
      %s28 = sshll.u32 [#allocation5], 4
      %s29 = int_to_ptr.vmem [resolvable:$true] %s28
      %34 = dma.hbm_to_vmem [thread:$0]  %s27, 10240, %s29, [#allocation6], 128, 128, 8
    $region9: #{tpu_custom_call.1} parent=1 // pred_fallthru
      _
    // Predicated region
    $region10: #{tpu_custom_call.1} parent=1 // pred_check
      _
    $region11: #{tpu_custom_call.1} parent=1 // pred_check_branch
      %36 = sbr.rel (0) target = $region13
    $region12: #{tpu_custom_call.1} parent=1 // pred_region
      %38 = vsyncadd [#allocation6], 0
      %s40 = sshll.u32 %s2, 4
      %s41 = int_to_ptr.hbm [resolvable:$true] %s40
      %s42 = sshll.u32 [#allocation7], 4
      %s43 = int_to_ptr.vmem [resolvable:$true] %s42
      %45 = dma.hbm_to_vmem [thread:$0]  %s41, 128, %s43, [#allocation6]
    $region13: #{tpu_custom_call.1} parent=1 // pred_fallthru
      _
    // Predicated region
    $region14: #{tpu_custom_call.1} parent=1 // pred_check
      _
    $region15: #{tpu_custom_call.1} parent=1 // pred_check_branch
      %47 = sbr.rel (0) target = $region17
    $region16: #{tpu_custom_call.1} parent=1 // pred_region
      %49 = dma.done [#allocation3], 128
    $region17: #{tpu_custom_call.1} parent=1 // pred_fallthru
      _
    // Predicated region
    $region18: #{tpu_custom_call.1} parent=1 // pred_check
      _
    $region19: #{tpu_custom_call.1} parent=1 // pred_check_branch
      %51 = sbr.rel (0) target = $region21
    $region20: #{tpu_custom_call.1} parent=1 // pred_region
      %53 = dma.done [#allocation6], 10240
    $region21: #{tpu_custom_call.1} parent=1 // pred_fallthru
      _
    // Predicated region
    $region22: #{tpu_custom_call.1} parent=1 // pred_check
      _
    $region23: #{tpu_custom_call.1} parent=1 // pred_check_branch
      %55 = sbr.rel (0) target = $region25
    $region24: #{tpu_custom_call.1} parent=1 // pred_region
      %57 = dma.done [#allocation6], 128
    $region25: #{tpu_custom_call.1} parent=1 // pred_fallthru
      _
    %v58 = vld [vmem:[#allocation2] sm:$0xff]
    %v59 = vld [vmem:[#allocation7] sm:$0xff]
    %v60 = vld [vmem:[#allocation5] sm:$0xff]
    %v61 = vld [vmem:[#allocation5 + $0x8] sm:$0xff]
    %v62 = vld [vmem:[#allocation5 + $0x10] sm:$0xff]
    %v63 = vld [vmem:[#allocation5 + $0x18] sm:$0xff]
    %v64 = vld [vmem:[#allocation5 + $0x20] sm:$0xff]
    %v65 = vld [vmem:[#allocation5 + $0x28] sm:$0xff]
    %v66 = vld [vmem:[#allocation5 + $0x30] sm:$0xff]
    %v67 = vld [vmem:[#allocation5 + $0x38] sm:$0xff]
    %v68 = vld [vmem:[#allocation5 + $0x40] sm:$0xff]
    %v69 = vld [vmem:[#allocation5 + $0x48] sm:$0xff]
    %v70 = vld [vmem:[#allocation5 + $0x50] sm:$0xff]
    %v71 = vld [vmem:[#allocation5 + $0x58] sm:$0xff]
    %v72 = vld [vmem:[#allocation5 + $0x60] sm:$0xff]
    %v73 = vld [vmem:[#allocation5 + $0x68] sm:$0xff]
    %v74 = vld [vmem:[#allocation5 + $0x70] sm:$0xff]
    %v75 = vld [vmem:[#allocation5 + $0x78] sm:$0xff]
    %v76 = vperm.slane %v59, 0
    %77 = vmatpush.msra.mxu0 %v75
    %78 = vmatpush.msra.mxu0 %v74
    %79 = vmatpush.msra.mxu0 %v73
    %80 = vmatpush.msra.mxu0 %v72
    %81 = vmatpush.msra.mxu0 %v71
    %82 = vmatpush.msra.mxu0 %v70
    %83 = vmatpush.msra.mxu0 %v69
    %84 = vmatpush.msra.mxu0 %v68
    %85 = vmatpush.msra.mxu0 %v67
    %86 = vmatpush.msra.mxu0 %v66
    %87 = vmatpush.msra.mxu0 %v65
    %88 = vmatpush.msra.mxu0 %v64
    %89 = vmatpush.msra.mxu0 %v63
    %90 = vmatpush.msra.mxu0 %v62
    %91 = vmatpush.msra.mxu0 %v61
    %92 = vmatpush.msra.mxu0 %v60
    %93 = vmatmul.f32.gmra.mxu0 %v58
    %v94 = vpop.f32.mrf.mxu0
    %v95 = vadd.f32 %v76, %v94
    %96 = vdwg.mxu0
    %v97 = vmax.f32 %v95, 0.0
    %v98 = vld [vmem:[#allocation5 + $0x80] sm:$0xff]
    %v99 = vld [vmem:[#allocation5 + $0x88] sm:$0xff]
    %v100 = vld [vmem:[#allocation5 + $0x90] sm:$0xff]
    %v101 = vld [vmem:[#allocation5 + $0x98] sm:$0xff]
    %v102 = vld [vmem:[#allocation5 + $0xa0] sm:$0xff]
    %v103 = vld [vmem:[#allocation5 + $0xa8] sm:$0xff]
    %v104 = vld [vmem:[#allocation5 + $0xb0] sm:$0xff]
    %v105 = vld [vmem:[#allocation5 + $0xb8] sm:$0xff]
    %v106 = vld [vmem:[#allocation5 + $0xc0] sm:$0xff]
    %v107 = vld [vmem:[#allocation5 + $0xc8] sm:$0xff]
    %v108 = vld [vmem:[#allocation5 + $0xd0] sm:$0xff]
    %v109 = vld [vmem:[#allocation5 + $0xd8] sm:$0xff]
    %v110 = vld [vmem:[#allocation5 + $0xe0] sm:$0xff]
    %v111 = vld [vmem:[#allocation5 + $0xe8] sm:$0xff]
    %v112 = vld [vmem:[#allocation5 + $0xf0] sm:$0xff]
    %v113 = vld [vmem:[#allocation5 + $0xf8] sm:$0xff]
    %v114 = vperm.slane %v59, 1
    %115 = vmatpush.msra.mxu0 %v113
    %116 = vmatpush.msra.mxu0 %v112
    %117 = vmatpush.msra.mxu0 %v111
    %118 = vmatpush.msra.mxu0 %v110
    %119 = vmatpush.msra.mxu0 %v109
    %120 = vmatpush.msra.mxu0 %v108
    %121 = vmatpush.msra.mxu0 %v107
    %122 = vmatpush.msra.mxu0 %v106
    %123 = vmatpush.msra.mxu0 %v105
    %124 = vmatpush.msra.mxu0 %v104
    %125 = vmatpush.msra.mxu0 %v103
    %126 = vmatpush.msra.mxu0 %v102
    %127 = vmatpush.msra.mxu0 %v101
    %128 = vmatpush.msra.mxu0 %v100
    %129 = vmatpush.msra.mxu0 %v99
    %130 = vmatpush.msra.mxu0 %v98
    %131 = vmatmul.f32.gmra.mxu0 %v97
    %v132 = vpop.f32.mrf.mxu0
    %v133 = vadd.f32 %v114, %v132
    %134 = vdwg.mxu0
    %v135 = vmax.f32 %v133, 0.0
    %v136 = vld [vmem:[#allocation5 + $0x100] sm:$0xff]
    %v137 = vld [vmem:[#allocation5 + $0x108] sm:$0xff]
    %v138 = vld [vmem:[#allocation5 + $0x110] sm:$0xff]
    %v139 = vld [vmem:[#allocation5 + $0x118] sm:$0xff]
    %v140 = vld [vmem:[#allocation5 + $0x120] sm:$0xff]
    %v141 = vld [vmem:[#allocation5 + $0x128] sm:$0xff]
    %v142 = vld [vmem:[#allocation5 + $0x130] sm:$0xff]
    %v143 = vld [vmem:[#allocation5 + $0x138] sm:$0xff]
    %v144 = vld [vmem:[#allocation5 + $0x140] sm:$0xff]
    %v145 = vld [vmem:[#allocation5 + $0x148] sm:$0xff]
    %v146 = vld [vmem:[#allocation5 + $0x150] sm:$0xff]
    %v147 = vld [vmem:[#allocation5 + $0x158] sm:$0xff]
    %v148 = vld [vmem:[#allocation5 + $0x160] sm:$0xff]
    %v149 = vld [vmem:[#allocation5 + $0x168] sm:$0xff]
    %v150 = vld [vmem:[#allocation5 + $0x170] sm:$0xff]
    %v151 = vld [vmem:[#allocation5 + $0x178] sm:$0xff]
    %v152 = vperm.slane %v59, 2
    %153 = vmatpush.msra.mxu0 %v151
    %154 = vmatpush.msra.mxu0 %v150
    %155 = vmatpush.msra.mxu0 %v149
    %156 = vmatpush.msra.mxu0 %v148
    %157 = vmatpush.msra.mxu0 %v147
    %158 = vmatpush.msra.mxu0 %v146
    %159 = vmatpush.msra.mxu0 %v145
    %160 = vmatpush.msra.mxu0 %v144
    %161 = vmatpush.msra.mxu0 %v143
    %162 = vmatpush.msra.mxu0 %v142
    %163 = vmatpush.msra.mxu0 %v141
    %164 = vmatpush.msra.mxu0 %v140
    %165 = vmatpush.msra.mxu0 %v139
    %166 = vmatpush.msra.mxu0 %v138
    %167 = vmatpush.msra.mxu0 %v137
    %168 = vmatpush.msra.mxu0 %v136
    %169 = vmatmul.f32.gmra.mxu0 %v135
    %v170 = vpop.f32.mrf.mxu0
    %v171 = vadd.f32 %v152, %v170
    %172 = vdwg.mxu0
    %v173 = vmax.f32 %v171, 0.0
    %v174 = vld [vmem:[#allocation5 + $0x180] sm:$0xff]
    %v175 = vld [vmem:[#allocation5 + $0x188] sm:$0xff]
    %v176 = vld [vmem:[#allocation5 + $0x190] sm:$0xff]
    %v177 = vld [vmem:[#allocation5 + $0x198] sm:$0xff]
    %v178 = vld [vmem:[#allocation5 + $0x1a0] sm:$0xff]
    %v179 = vld [vmem:[#allocation5 + $0x1a8] sm:$0xff]
    %v180 = vld [vmem:[#allocation5 + $0x1b0] sm:$0xff]
    %v181 = vld [vmem:[#allocation5 + $0x1b8] sm:$0xff]
    %v182 = vld [vmem:[#allocation5 + $0x1c0] sm:$0xff]
    %v183 = vld [vmem:[#allocation5 + $0x1c8] sm:$0xff]
    %v184 = vld [vmem:[#allocation5 + $0x1d0] sm:$0xff]
    %v185 = vld [vmem:[#allocation5 + $0x1d8] sm:$0xff]
    %v186 = vld [vmem:[#allocation5 + $0x1e0] sm:$0xff]
    %v187 = vld [vmem:[#allocation5 + $0x1e8] sm:$0xff]
    %v188 = vld [vmem:[#allocation5 + $0x1f0] sm:$0xff]
    %v189 = vld [vmem:[#allocation5 + $0x1f8] sm:$0xff]
    %v190 = vperm.slane %v59, 3
    %191 = vmatpush.msra.mxu0 %v189
    %192 = vmatpush.msra.mxu0 %v188
    %193 = vmatpush.msra.mxu0 %v187
    %194 = vmatpush.msra.mxu0 %v186
    %195 = vmatpush.msra.mxu0 %v185
    %196 = vmatpush.msra.mxu0 %v184
    %197 = vmatpush.msra.mxu0 %v183
    %198 = vmatpush.msra.mxu0 %v182
    %199 = vmatpush.msra.mxu0 %v181
    %200 = vmatpush.msra.mxu0 %v180
    %201 = vmatpush.msra.mxu0 %v179
    %202 = vmatpush.msra.mxu0 %v178
    %203 = vmatpush.msra.mxu0 %v177
    %204 = vmatpush.msra.mxu0 %v176
    %205 = vmatpush.msra.mxu0 %v175
    %206 = vmatpush.msra.mxu0 %v174
    %207 = vmatmul.f32.gmra.mxu0 %v173
    %v208 = vpop.f32.mrf.mxu0
    %v209 = vadd.f32 %v190, %v208
    %210 = vdwg.mxu0
    %v211 = vmax.f32 %v209, 0.0
    %v212 = vld [vmem:[#allocation5 + $0x200] sm:$0xff]
    %v213 = vld [vmem:[#allocation5 + $0x208] sm:$0xff]
    %v214 = vld [vmem:[#allocation5 + $0x210] sm:$0xff]
    %v215 = vld [vmem:[#allocation5 + $0x218] sm:$0xff]
    %v216 = vld [vmem:[#allocation5 + $0x220] sm:$0xff]
    %v217 = vld [vmem:[#allocation5 + $0x228] sm:$0xff]
    %v218 = vld [vmem:[#allocation5 + $0x230] sm:$0xff]
    %v219 = vld [vmem:[#allocation5 + $0x238] sm:$0xff]
    %v220 = vld [vmem:[#allocation5 + $0x240] sm:$0xff]
    %v221 = vld [vmem:[#allocation5 + $0x248] sm:$0xff]
    %v222 = vld [vmem:[#allocation5 + $0x250] sm:$0xff]
    %v223 = vld [vmem:[#allocation5 + $0x258] sm:$0xff]
    %v224 = vld [vmem:[#allocation5 + $0x260] sm:$0xff]
    %v225 = vld [vmem:[#allocation5 + $0x268] sm:$0xff]
    %v226 = vld [vmem:[#allocation5 + $0x270] sm:$0xff]
    %v227 = vld [vmem:[#allocation5 + $0x278] sm:$0xff]
    %v228 = vperm.slane %v59, 4
    %229 = vmatpush.msra.mxu0 %v227
    %230 = vmatpush.msra.mxu0 %v226
    %231 = vmatpush.msra.mxu0 %v225
    %232 = vmatpush.msra.mxu0 %v224
    %233 = vmatpush.msra.mxu0 %v223
    %234 = vmatpush.msra.mxu0 %v222
    %235 = vmatpush.msra.mxu0 %v221
    %236 = vmatpush.msra.mxu0 %v220
    %237 = vmatpush.msra.mxu0 %v219
    %238 = vmatpush.msra.mxu0 %v218
    %239 = vmatpush.msra.mxu0 %v217
    %240 = vmatpush.msra.mxu0 %v216
    %241 = vmatpush.msra.mxu0 %v215
    %242 = vmatpush.msra.mxu0 %v214
    %243 = vmatpush.msra.mxu0 %v213
    %244 = vmatpush.msra.mxu0 %v212
    %245 = vmatmul.f32.gmra.mxu0 %v211
    %v246 = vpop.f32.mrf.mxu0
    %v247 = vadd.f32 %v228, %v246
    %248 = vdwg.mxu0
    %v249 = vlaneseq
    %v250 = vand.u32 %v249, 127
    %vm251 = vcmp.lt.s32.totalorder %v250, 4
    %v252 = vsel %vm251, 1, 0
    %v253 = vcvt.s32.f32 %v252
    %vm254 = vcmp.eq.s32.totalorder %v250, 4
    %v255 = vsel %vm254, 1, 0
    %v256 = vcvt.s32.f32 %v255
    %v257 = vmul.f32 %v247, %v253
    %258 = vadd.xlane.f32.xlu0 %v257
    %v259 = vpop.xlane.xlu0 %258
    %v260 = vmul.f32 %v259, 0.25
    %v261 = vmul.f32 %v247, %v256
    %262 = vadd.xlane.f32.xlu0 %v261
    %v263 = vpop.xlane.xlu0 %262
    %v264 = vadd.f32 %v247, %v263
    %v265 = vsub.f32 %v264, %v260
    %v266 = vmul.f32 %v265, %v253
    %267 = vst [vmem:[#allocation8] sm:$0xff] %v266
    // Predicated region
    $region26: #{tpu_custom_call.1} parent=1 // pred_check
      _
    $region27: #{tpu_custom_call.1} parent=1 // pred_check_branch
      %269 = sbr.rel (0) target = $region29
    $region28: #{tpu_custom_call.1} parent=1 // pred_region
      %271 = vsyncadd [#allocation4], 0
      %s273 = sshll.u32 [#allocation8], 4
      %s274 = int_to_ptr.vmem [resolvable:$true] %s273
      %s275 = sshll.u32 %s3, 4
      %s276 = int_to_ptr.hbm [resolvable:$true] %s275
      %278 = dma.vmem_to_hbm [thread:$0]  %s274, 128, %s276, [#allocation4]
    $region29: #{tpu_custom_call.1} parent=1 // pred_fallthru
      _
    // Predicated region
    $region30: #{tpu_custom_call.1} parent=1 // pred_check
      _
    $region31: #{tpu_custom_call.1} parent=1 // pred_check_branch
      %280 = sbr.rel (0) target = $region33
    $region32: #{tpu_custom_call.1} parent=1 // pred_region
      %282 = dma.done [#allocation4], 128
    $region33: #{tpu_custom_call.1} parent=1 // pred_fallthru
      _
    %283 = vsyncpa [#allocation3], 1
    %284 = vsyncpa [#allocation6], 1
    %285 = vsyncpa [#allocation4], 1

</llo_original>
